<compile_context>
chip_gen: v7x
topology: tpu7x:2x2x1
jax: 0.10.0
libtpu: 0.0.40
codegen_flags: <defaults>
</compile_context>

<pallas_src>
import functools

import jax
import jax.numpy as jnp
from jax.experimental import pallas as pl
from jax.experimental.pallas import tpu as pltpu

_TILE_CANDIDATES = (2048, 1024, 512, 256, 128)


def _round_up(v, m):
    return (v + m - 1) // m * m


def _vmem_budget():
    """~75% of chip VMEM: ~48 MiB on v7x (64 MiB/TC), ~96 MiB on v5e/v6e."""
    cap = 64 * 1024 * 1024  # conservative fallback (v7x per-TensorCore)
    try:
        info = pltpu.get_tpu_info()
        cap = int(getattr(info, "vmem_capacity_bytes",
                          getattr(info, "vmem_size_bytes", cap)))
    except Exception:
        pass
    return (cap // 4) * 3


def _vmem_footprint(tm, tk, f_in_pad, f_out_pad, acc_cols, out_bytes):
    """Estimated VMEM bytes for one layer at tile (tm, tk), double-buffered."""
    return (2 * tm * tk * 1                      # A tile, int8
            + 2 * tk * f_in_pad * 2              # X neighbor tile, bf16
            + 2 * tm * f_in_pad * 2              # X root tile, bf16
            + 2 * tm * 128 * 4                   # deg_inv (lane-padded), f32
            + 2 * 2 * f_in_pad * f_out_pad * 2   # W_l + W_r, bf16
            + 2 * 8 * f_out_pad * 4              # bias (sublane-padded), f32
            + tm * acc_cols * 4                  # f32 accumulator scratch
            + 2 * tm * f_out_pad * out_bytes)    # output tile


def _pick_tile(n_pad_min, layer_geoms, vmem_budget):
    """Largest tile that fits VMEM on every layer (v7x cap handled via budget)."""
    tile = 128
    for t in _TILE_CANDIDATES:
        if t > n_pad_min:
            continue
        if all(_vmem_footprint(t, t, *g) <= vmem_budget for g in layer_geoms):
            tile = t
            break
    # Prefer >= 2 row tiles so both v7x TensorCores get work (row axis parallel).
    while tile > 128 and n_pad_min // tile < 2:
        tile //= 2
    return tile


def _sage_layer_kernel(a_ref, xn_ref, xr_ref, dinv_ref, wl_ref, wr_ref, b_ref,
                       o_ref, acc_ref, *, apply_relu, pre_transform):
    """Tiled SAGEConv layer.

    k-loop:   acc += A_counts_tile @ Xn_tile       (or @ (Xn_tile @ W_l))
    epilogue: out = (deg_inv * acc) [@ W_l] + Xr @ W_r + b   (+ relu)
    """
    k = pl.program_id(1)

    @pl.when(k == 0)
    def _():
        acc_ref[...] = jnp.zeros_like(acc_ref)

    # int8 edge counts -> bf16 (exact for small counts) for the MXU.
    a = a_ref[...].astype(jnp.float32).astype(jnp.bfloat16)
    if pre_transform:
        # Associativity: A @ (X W_l) — aggregate over the narrower output width.
        xn = jnp.dot(xn_ref[...], wl_ref[...],
                     preferred_element_type=jnp.float32).astype(jnp.bfloat16)
    else:
        xn = xn_ref[...]
    acc_ref[...] += jnp.dot(a, xn, preferred_element_type=jnp.float32)

    @pl.when(k == pl.num_programs(1) - 1)
    def _():
        dinv = dinv_ref[...]                      # (tm, 1) f32 = 1/in_degree
        if pre_transform:
            out = acc_ref[...] * dinv             # == (mean agg) @ W_l, f32
        else:
            agg = (acc_ref[...] * dinv).astype(jnp.bfloat16)
            out = jnp.dot(agg, wl_ref[...], preferred_element_type=jnp.float32)
        # Root term as a second MXU dot on its own weight ref (no concat copy).
        out = out + jnp.dot(xr_ref[...], wr_ref[...],
                            preferred_element_type=jnp.float32)
        out = out + b_ref[...]
        if apply_relu:
            out = jnp.maximum(out, 0.0)
        o_ref[...] = out.astype(o_ref.dtype)


def sage_layer(a_pad, dinv_pad, x_pad, w_l, w_r, b, *, tm, apply_relu,
               out_dtype, vmem_limit):
    """One SAGEConv layer on padded inputs.

    a_pad:    (Np, Np)     int8 edge counts A[i, j] = #edges j->i (zero-padded)
    dinv_pad: (Np, 1)      f32 1/in_degree (0 for isolated / padded nodes)
    x_pad:    (Np, Fi_pad) bf16 node features (zero-padded feature columns)
    w_l, w_r: (F_in, F_out) f32 neighbor / root weights (already transposed)
    b:        (1, F_out)   f32 bias
    Returns (Np, Fo_pad) out_dtype; padded feature columns are exactly zero.
    """
    n_pad = a_pad.shape[0]
    f_in_pad = x_pad.shape[1]
    f_in, f_out = w_l.shape
    f_out_pad = _round_up(max(f_out, 128), 128)
    pre_transform = f_out_pad < f_in_pad
    acc_cols = f_out_pad if pre_transform else f_in_pad

    wl_pad = (jnp.zeros((f_in_pad, f_out_pad), jnp.float32)
              .at[:f_in, :f_out].set(w_l).astype(jnp.bfloat16))
    wr_pad = (jnp.zeros((f_in_pad, f_out_pad), jnp.float32)
              .at[:f_in, :f_out].set(w_r).astype(jnp.bfloat16))
    b_pad = jnp.zeros((1, f_out_pad), jnp.float32).at[:, :f_out].set(b)

    tk = tm
    grid = (n_pad // tm, n_pad // tk)
    grid_i = grid[0]
    out_bytes = jnp.dtype(out_dtype).itemsize

    if pre_transform:
        flops = (2 * grid_i * n_pad * f_in_pad * f_out_pad   # Xn @ W_l per row tile
                 + 2 * n_pad * n_pad * f_out_pad)            # A @ (X W_l)
    else:
        flops = (2 * n_pad * n_pad * f_in_pad                # A @ X
                 + 2 * n_pad * f_in_pad * f_out_pad)         # agg @ W_l
    flops += 2 * n_pad * f_in_pad * f_out_pad                # x_root @ W_r
    bytes_accessed = (n_pad * n_pad * 1                      # A (int8)
                      + grid_i * n_pad * f_in_pad * 2        # X re-streamed per row tile
                      + n_pad * f_in_pad * 2                 # X root
                      + n_pad * 4                            # deg_inv
                      + 2 * f_in_pad * f_out_pad * 2         # W_l + W_r
                      + f_out_pad * 4                        # bias
                      + n_pad * f_out_pad * out_bytes)       # output
    cost = pl.CostEstimate(flops=int(flops), transcendentals=0,
                           bytes_accessed=int(bytes_accessed))

    kernel = functools.partial(_sage_layer_kernel, apply_relu=apply_relu,
                               pre_transform=pre_transform)
    return pl.pallas_call(
        kernel,
        out_shape=jax.ShapeDtypeStruct((n_pad, f_out_pad), out_dtype),
        grid_spec=pltpu.PrefetchScalarGridSpec(
            num_scalar_prefetch=0,
            grid=grid,
            in_specs=[
                pl.BlockSpec((tm, tk), lambda i, k: (i, k)),              # A counts
                pl.BlockSpec((tk, f_in_pad), lambda i, k: (k, 0)),        # X (neighbor rows)
                pl.BlockSpec((tm, f_in_pad), lambda i, k: (i, 0)),        # X (root rows)
                pl.BlockSpec((tm, 1), lambda i, k: (i, 0)),               # 1/deg
                pl.BlockSpec((f_in_pad, f_out_pad), lambda i, k: (0, 0)), # W_l
                pl.BlockSpec((f_in_pad, f_out_pad), lambda i, k: (0, 0)), # W_r
                pl.BlockSpec((1, f_out_pad), lambda i, k: (0, 0)),        # bias
            ],
            out_specs=pl.BlockSpec((tm, f_out_pad), lambda i, k: (i, 0)),
            scratch_shapes=[pltpu.VMEM((tm, acc_cols), jnp.float32)],
        ),
        compiler_params=pltpu.CompilerParams(
            dimension_semantics=("parallel", "arbitrary"),
            vmem_limit_bytes=int(vmem_limit),
        ),
        cost_estimate=cost,
    )(a_pad, x_pad, x_pad, dinv_pad, wl_pad, wr_pad, b_pad)


def build_adjacency_counts(edge_index, num_nodes):
    """A[i, j] = #edges j->i (int8) and deg_inv[i] = 1/in_deg(i) (f32, 0 if isolated)."""
    src = edge_index[0]
    dst = edge_index[1]
    counts = jnp.zeros((num_nodes, num_nodes), jnp.float32).at[dst, src].add(1.0)
    deg = counts.sum(axis=1, keepdims=True)
    deg_inv = jnp.where(deg > 0, 1.0 / jnp.maximum(deg, 1.0), 0.0)
    # Edge multiplicities must fit int8 (<=127); true for simple graphs.
    return counts.astype(jnp.int8), deg_inv


def init_params(key, input_dim, hidden_dim, output_dim, num_layers):
    """Deterministic Glorot-uniform init mirroring PyG SAGEConv parameters."""
    dims = [input_dim] + [hidden_dim] * (num_layers - 1) + [output_dim]
    params = []
    for i in range(num_layers):
        f_in, f_out = dims[i], dims[i + 1]
        key, k1, k2 = jax.random.split(key, 3)
        limit = jnp.sqrt(6.0 / (f_in + f_out))
        w_l = jax.random.uniform(k1, (f_in, f_out), jnp.float32, -limit, limit)
        w_r = jax.random.uniform(k2, (f_in, f_out), jnp.float32, -limit, limit)
        b = jnp.zeros((1, f_out), jnp.float32)
        params.append((w_l, w_r, b))
    return params


def graphsage_forward(params, x, edge_index):
    n, f_in = x.shape
    num_layers = len(params)
    f_out_final = params[-1][0].shape[1]

    # Per-layer padded geometry -> per-generation tile choice (VMEM-budgeted).
    dims = [f_in] + [p[0].shape[1] for p in params]
    dims_pad = [_round_up(max(d, 128), 128) for d in dims]
    layer_geoms = []
    for i in range(num_layers):
        fi, fo = dims_pad[i], dims_pad[i + 1]
        acc_cols = fo if fo < fi else fi
        out_bytes = 4 if i == num_layers - 1 else 2
        layer_geoms.append((fi, fo, acc_cols, out_bytes))

    budget = _vmem_budget()
    n_pad_min = _round_up(n, 128)
    tm = _pick_tile(n_pad_min, layer_geoms, budget)
    n_pad = _round_up(n, tm)

    counts, deg_inv = build_adjacency_counts(edge_index, n)
    a_pad = jnp.zeros((n_pad, n_pad), jnp.int8).at[:n, :n].set(counts)
    dinv_pad = jnp.zeros((n_pad, 1), jnp.float32).at[:n, :].set(deg_inv)

    h = (jnp.zeros((n_pad, dims_pad[0]), jnp.float32)
         .at[:n, :f_in].set(x).astype(jnp.bfloat16))
    for i, (w_l, w_r, b) in enumerate(params):
        last = i == num_layers - 1
        # Hidden layers emit bf16 straight from the kernel; final layer f32.
        h = sage_layer(a_pad, dinv_pad, h, w_l, w_r, b,
                       tm=tm, apply_relu=not last,
                       out_dtype=jnp.float32 if last else jnp.bfloat16,
                       vmem_limit=budget)
    return h[:n, :f_out_final]


def graphsage_reference(params, x, edge_index):
    """Pure-JAX f32 reference for correctness checking."""
    counts, deg_inv = build_adjacency_counts(edge_index, x.shape[0])
    a = counts.astype(jnp.float32) * deg_inv
    h = x
    for i, (w_l, w_r, b) in enumerate(params):
        out = (a @ h) @ w_l + h @ w_r + b
        if i != len(params) - 1:
            out = jnp.maximum(out, 0.0)
        h = out
    return h


if __name__ == "__main__":
    key = jax.random.PRNGKey(0)
    k_x, k_e, k_p = jax.random.split(key, 3)

    # Small synthetic graph: 16 nodes, 48 directed edges.
    num_nodes = 16
    num_edges = 48
    input_dim, hidden_dim, output_dim, num_layers = 16, 32, 8, 3

    x = jax.random.normal(k_x, (num_nodes, input_dim), jnp.float32)
    edge_index = jax.random.randint(k_e, (2, num_edges), 0, num_nodes, jnp.int32)

    params = init_params(k_p, input_dim, hidden_dim, output_dim, num_layers)

    out = graphsage_forward(params, x, edge_index)
    jax.block_until_ready(out)
    assert out.shape == (num_nodes, output_dim)

    ref = graphsage_reference(params, x, edge_index)
    max_err = float(jnp.max(jnp.abs(out - ref)))
    assert max_err < 1e-1, f"max abs error vs reference too large: {max_err}"

    print("KERNEL_OK")
</pallas_src>

<mosaic_0001>
module attributes {stable_mosaic.version = 11 : i64} {
  func.func @_sage_layer_kernel(%arg0: i32, %arg1: i32, %arg2: memref<128x128xi8, #tpu.memory_space<vmem>>, %arg3: memref<128x128xbf16, #tpu.memory_space<vmem>>, %arg4: memref<128x128xbf16, #tpu.memory_space<vmem>>, %arg5: memref<128x1xf32, #tpu.memory_space<vmem>>, %arg6: memref<128x128xbf16, #tpu.memory_space<vmem>>, %arg7: memref<128x128xbf16, #tpu.memory_space<vmem>>, %arg8: memref<1x128xf32, #tpu.memory_space<vmem>>, %arg9: memref<128x128xbf16, #tpu.memory_space<vmem>>, %arg10: memref<128x128xf32, #tpu.memory_space<vmem>>) attributes {dimension_semantics = [#tpu.dimension_semantics<parallel>, #tpu.dimension_semantics<arbitrary>], iteration_bounds = array<i64: 1, 1>, scalar_prefetch = 0 : i64, scratch_operands = 1 : i64, tpu.core_type = #tpu.core_type<tc>, window_params = [{transform_indices = @transform_0, window_bounds = array<i64: 128, 128>}, {transform_indices = @transform_1, window_bounds = array<i64: 128, 128>}, {transform_indices = @transform_2, window_bounds = array<i64: 128, 128>}, {transform_indices = @transform_3, window_bounds = array<i64: 128, 1>}, {pipeline_mode = #tpu.pipeline_mode<synchronous>, transform_indices = @transform_4, window_bounds = array<i64: 128, 128>}, {pipeline_mode = #tpu.pipeline_mode<synchronous>, transform_indices = @transform_5, window_bounds = array<i64: 128, 128>}, {pipeline_mode = #tpu.pipeline_mode<synchronous>, transform_indices = @transform_6, window_bounds = array<i64: 1, 128>}, {transform_indices = @transform_7, window_bounds = array<i64: 128, 128>}]} {
    %c0_i32 = arith.constant 0 : i32
    %0 = arith.cmpi eq, %arg1, %c0_i32 : i32
    %1 = arith.extui %0 : i1 to i32
    %c0_i32_0 = arith.constant 0 : i32
    %2 = arith.cmpi ne, %1, %c0_i32_0 : i32
    scf.if %2 {
      %cst_10 = arith.constant 0.000000e+00 : f32
      %14 = vector.broadcast %cst_10 : f32 to vector<128x128xf32>
      %c0_11 = arith.constant 0 : index
      %c0_12 = arith.constant 0 : index
      %15 = vector.load %arg10[%c0_11, %c0_12] : memref<128x128xf32, #tpu.memory_space<vmem>>, vector<128x128xf32>
      tpu.vector_store %arg10[%c0_11, %c0_12], %14 {strides = array<i32>} : memref<128x128xf32, #tpu.memory_space<vmem>>, vector<128x128xf32>,
    } else {
    }
    %c0 = arith.constant 0 : index
    %c0_1 = arith.constant 0 : index
    %3 = vector.load %arg2[%c0, %c0_1] : memref<128x128xi8, #tpu.memory_space<vmem>>, vector<128x128xi8>
    %4 = arith.sitofp %3 : vector<128x128xi8> to vector<128x128xf32>
    %5 = arith.truncf %4 : vector<128x128xf32> to vector<128x128xbf16>
    %c0_2 = arith.constant 0 : index
    %c0_3 = arith.constant 0 : index
    %6 = vector.load %arg3[%c0_2, %c0_3] : memref<128x128xbf16, #tpu.memory_space<vmem>>, vector<128x128xbf16>
    %c0_4 = arith.constant 0 : index
    %c0_5 = arith.constant 0 : index
    %7 = vector.load %arg10[%c0_4, %c0_5] : memref<128x128xf32, #tpu.memory_space<vmem>>, vector<128x128xf32>
    %cst = arith.constant dense<0.000000e+00> : vector<128x128xf32>
    %8 = tpu.matmul %5, %6, %cst {dimension_numbers = #tpu.dot_dimension_numbers<[1], [0], [0], [1], [0, 0, 1, 1], [], []>} : vector<128x128xbf16>, vector<128x128xbf16>, vector<128x128xf32> -> vector<128x128xf32>
    %9 = arith.addf %7, %8 : vector<128x128xf32>
    %c0_6 = arith.constant 0 : index
    %c0_7 = arith.constant 0 : index
    %10 = vector.load %arg10[%c0_6, %c0_7] : memref<128x128xf32, #tpu.memory_space<vmem>>, vector<128x128xf32>
    tpu.vector_store %arg10[%c0_6, %c0_7], %9 {strides = array<i32>} : memref<128x128xf32, #tpu.memory_space<vmem>>, vector<128x128xf32>,
    %c0_i32_8 = arith.constant 0 : i32
    %11 = arith.cmpi eq, %arg1, %c0_i32_8 : i32
    %12 = arith.extui %11 : i1 to i32
    %c0_i32_9 = arith.constant 0 : i32
    %13 = arith.cmpi ne, %12, %c0_i32_9 : i32
    scf.if %13 {
      %c0_10 = arith.constant 0 : index
      %c0_11 = arith.constant 0 : index
      %14 = vector.load %arg5[%c0_10, %c0_11] : memref<128x1xf32, #tpu.memory_space<vmem>>, vector<128x1xf32>
      %c0_12 = arith.constant 0 : index
      %c0_13 = arith.constant 0 : index
      %15 = vector.load %arg10[%c0_12, %c0_13] : memref<128x128xf32, #tpu.memory_space<vmem>>, vector<128x128xf32>
      %16 = vector.broadcast %14 : vector<128x1xf32> to vector<128x128xf32>
      %17 = arith.mulf %15, %16 : vector<128x128xf32>
      %18 = arith.truncf %17 : vector<128x128xf32> to vector<128x128xbf16>
      %c0_14 = arith.constant 0 : index
      %c0_15 = arith.constant 0 : index
      %19 = vector.load %arg6[%c0_14, %c0_15] : memref<128x128xbf16, #tpu.memory_space<vmem>>, vector<128x128xbf16>
      %cst_16 = arith.constant dense<0.000000e+00> : vector<128x128xf32>
      %20 = tpu.matmul %18, %19, %cst_16 {dimension_numbers = #tpu.dot_dimension_numbers<[1], [0], [0], [1], [0, 0, 1, 1], [], []>} : vector<128x128xbf16>, vector<128x128xbf16>, vector<128x128xf32> -> vector<128x128xf32>
      %c0_17 = arith.constant 0 : index
      %c0_18 = arith.constant 0 : index
      %21 = vector.load %arg4[%c0_17, %c0_18] : memref<128x128xbf16, #tpu.memory_space<vmem>>, vector<128x128xbf16>
      %c0_19 = arith.constant 0 : index
      %c0_20 = arith.constant 0 : index
      %22 = vector.load %arg7[%c0_19, %c0_20] : memref<128x128xbf16, #tpu.memory_space<vmem>>, vector<128x128xbf16>
      %cst_21 = arith.constant dense<0.000000e+00> : vector<128x128xf32>
      %23 = tpu.matmul %21, %22, %cst_21 {dimension_numbers = #tpu.dot_dimension_numbers<[1], [0], [0], [1], [0, 0, 1, 1], [], []>} : vector<128x128xbf16>, vector<128x128xbf16>, vector<128x128xf32> -> vector<128x128xf32>
      %24 = arith.addf %20, %23 : vector<128x128xf32>
      %c0_22 = arith.constant 0 : index
      %c0_23 = arith.constant 0 : index
      %25 = vector.load %arg8[%c0_22, %c0_23] : memref<1x128xf32, #tpu.memory_space<vmem>>, vector<1x128xf32>
      %26 = vector.broadcast %25 : vector<1x128xf32> to vector<128x128xf32>
      %27 = arith.addf %24, %26 : vector<128x128xf32>
      %cst_24 = arith.constant 0.000000e+00 : f32
      %28 = vector.broadcast %cst_24 : f32 to vector<128x128xf32>
      %29 = arith.maximumf %27, %28 : vector<128x128xf32>
      %30 = arith.truncf %29 : vector<128x128xf32> to vector<128x128xbf16>
      %c0_25 = arith.constant 0 : index
      %c0_26 = arith.constant 0 : index
      %31 = vector.load %arg9[%c0_25, %c0_26] : memref<128x128xbf16, #tpu.memory_space<vmem>>, vector<128x128xbf16>
      tpu.vector_store %arg9[%c0_25, %c0_26], %30 {strides = array<i32>} : memref<128x128xbf16, #tpu.memory_space<vmem>>, vector<128x128xbf16>,
    } else {
    }
    return
  }
  func.func @transform_0(%arg0: i32, %arg1: i32) -> (i32, i32) {
    %c0_i32 = arith.constant 0 : i32
    return %arg0, %arg1 : i32, i32
  }
  func.func @transform_1(%arg0: i32, %arg1: i32) -> (i32, i32) {
    %c0_i32 = arith.constant 0 : i32
    %c0_i32_0 = arith.constant 0 : i32
    return %arg1, %c0_i32 : i32, i32
  }
  func.func @transform_2(%arg0: i32, %arg1: i32) -> (i32, i32) {
    %c0_i32 = arith.constant 0 : i32
    %c0_i32_0 = arith.constant 0 : i32
    return %arg0, %c0_i32 : i32, i32
  }
  func.func @transform_3(%arg0: i32, %arg1: i32) -> (i32, i32) {
    %c0_i32 = arith.constant 0 : i32
    %c0_i32_0 = arith.constant 0 : i32
    return %arg0, %c0_i32 : i32, i32
  }
  func.func @transform_4(%arg0: i32, %arg1: i32) -> (i32, i32) {
    %c0_i32 = arith.constant 0 : i32
    %c0_i32_0 = arith.constant 0 : i32
    %c0_i32_1 = arith.constant 0 : i32
    return %c0_i32, %c0_i32_0 : i32, i32
  }
  func.func @transform_5(%arg0: i32, %arg1: i32) -> (i32, i32) {
    %c0_i32 = arith.constant 0 : i32
    %c0_i32_0 = arith.constant 0 : i32
    %c0_i32_1 = arith.constant 0 : i32
    return %c0_i32, %c0_i32_0 : i32, i32
  }
  func.func @transform_6(%arg0: i32, %arg1: i32) -> (i32, i32) {
    %c0_i32 = arith.constant 0 : i32
    %c0_i32_0 = arith.constant 0 : i32
    %c0_i32_1 = arith.constant 0 : i32
    return %c0_i32, %c0_i32_0 : i32, i32
  }
  func.func @transform_7(%arg0: i32, %arg1: i32) -> (i32, i32) {
    %c0_i32 = arith.constant 0 : i32
    %c0_i32_0 = arith.constant 0 : i32
    return %arg0, %c0_i32 : i32, i32
  }
}

</mosaic_0001>

<llo_original>
// kernel: tpu_custom_call.1
$region0: #{tpu_custom_call.1}
  #allocation0 [shape = 'u32[]', space=smem, size = 0x4, offset = 0x4, fixed_abs, tag = 'smem constant byte address 0x4 - core index']
  #allocation1 [shape = 'u32[144,128]{1,0:T(1,128)}', space=vmem, size = 0x12000, scoped, tag = 'internal scratch']
  #allocation2 [shape = 'f32[128,128]{1,0:T(8,128)}', space=vmem, size = 0x10000, scoped, tag = 'scratch operand']
  %s0 = inlined_call_operand.hbm [shape: s8[128,128], index: 0, kind: input, shape index: {}]
  %s1 = inlined_call_operand.vmem [shape: bf16[128,128], index: 1, kind: input, shape index: {}]
  %s2 = inlined_call_operand.vmem [shape: bf16[128,128], index: 2, kind: input, shape index: {}]
  %s3 = inlined_call_operand.vmem [shape: f32[128,1], index: 3, kind: input, shape index: {}]
  %s4 = inlined_call_operand.hbm [shape: bf16[128,128], index: 4, kind: input, shape index: {}]
  %s5 = inlined_call_operand.hbm [shape: bf16[128,128], index: 5, kind: input, shape index: {}]
  %s6 = inlined_call_operand.vmem [shape: f32[1,128], index: 6, kind: input, shape index: {}]
  %s7 = inlined_call_operand.hbm [shape: bf16[128,128], index: 7, kind: output, shape index: {}]
  %s8 = sld [smem:[#allocation0]]
  $region58: #{tpu_custom_call.1} parent=0
    _
  %s10 = ssub.s32 1, %s8
  %s11 = scalar_select 0, %s10, %s8
  $region1: #{tpu_custom_call.1} parent=0
    #allocation3 [shape = 'u8[16384]{0}', space=vmem, size = 0x4000, scoped, tag = 'input window, operand 0, single buffered']
    #allocation4 [shape = 's32[1]{0}', space=sflag, size = 0x4, scoped, tag = 'scoped memory for tpu_custom_call.1']
    #allocation5 [shape = 's32[1]{0}', space=sflag, size = 0x4, scoped, tag = 'scoped memory for tpu_custom_call.1']
    #allocation6 [shape = 'u8[32768]{0}', space=vmem, size = 0x8000, scoped, tag = 'input window, operand 4, single buffered']
    #allocation7 [shape = 's32[1]{0}', space=sflag, size = 0x4, scoped, tag = 'scoped memory for tpu_custom_call.1']
    #allocation8 [shape = 'u8[32768]{0}', space=vmem, size = 0x8000, scoped, tag = 'input window, operand 5, single buffered']
    #allocation9 [shape = 'u8[32768]{0}', space=vmem, size = 0x8000, scoped, tag = 'output window, operand 0, single buffered']
    %12 = vsyncpa [#allocation4], 0
    %13 = vsyncpa [#allocation7], 0
    %14 = vsyncpa [#allocation5], 0
    // Predicated region
    $region2: #{tpu_custom_call.1} parent=1 // pred_check
      _
    $region3: #{tpu_custom_call.1} parent=1 // pred_check_branch
      %16 = sbr.rel (0) target = $region5
    $region4: #{tpu_custom_call.1} parent=1 // pred_region
      %s18 = ssub.s32 512, 512
      %19 = vsyncadd [#allocation4], %s18
      %s20 = sshll.u32 [#allocation3], 4
      %s21 = int_to_ptr.vmem [resolvable:$true] %s20
      %26 = dma.hbm_to_vmem [thread:$0]  %s0, 512, %s21, [#allocation4], 128, 128, 8
    $region5: #{tpu_custom_call.1} parent=1 // pred_fallthru
      _
    // Predicated region
    $region6: #{tpu_custom_call.1} parent=1 // pred_check
      _
    $region7: #{tpu_custom_call.1} parent=1 // pred_check_branch
      %28 = sbr.rel (0) target = $region9
    $region8: #{tpu_custom_call.1} parent=1 // pred_region
      _
    $region9: #{tpu_custom_call.1} parent=1 // pred_fallthru
      _
    // Predicated region
    $region10: #{tpu_custom_call.1} parent=1 // pred_check
      _
    $region11: #{tpu_custom_call.1} parent=1 // pred_check_branch
      %30 = sbr.rel (0) target = $region13
    $region12: #{tpu_custom_call.1} parent=1 // pred_region
      _
    $region13: #{tpu_custom_call.1} parent=1 // pred_fallthru
      _
    // Predicated region
    $region14: #{tpu_custom_call.1} parent=1 // pred_check
      _
    $region15: #{tpu_custom_call.1} parent=1 // pred_check_branch
      %32 = sbr.rel (0) target = $region17
    $region16: #{tpu_custom_call.1} parent=1 // pred_region
      _
    $region17: #{tpu_custom_call.1} parent=1 // pred_fallthru
      _
    // Predicated region
    $region18: #{tpu_custom_call.1} parent=1 // pred_check
      _
    $region19: #{tpu_custom_call.1} parent=1 // pred_check_branch
      %34 = sbr.rel (0) target = $region21
    $region20: #{tpu_custom_call.1} parent=1 // pred_region
      %s36 = ssub.s32 1024, 1024
      %37 = vsyncadd [#allocation7], %s36
      %s38 = sshll.u32 [#allocation6], 4
      %s39 = int_to_ptr.vmem [resolvable:$true] %s38
      %44 = dma.hbm_to_vmem [thread:$0]  %s4, 1024, %s39, [#allocation7], 64, 64, 4
    $region21: #{tpu_custom_call.1} parent=1 // pred_fallthru
      _
    // Predicated region
    $region22: #{tpu_custom_call.1} parent=1 // pred_check
      _
    $region23: #{tpu_custom_call.1} parent=1 // pred_check_branch
      %46 = sbr.rel (0) target = $region25
    $region24: #{tpu_custom_call.1} parent=1 // pred_region
      %s48 = ssub.s32 1024, 1024
      %49 = vsyncadd [#allocation7], %s48
      %s50 = sshll.u32 [#allocation8], 4
      %s51 = int_to_ptr.vmem [resolvable:$true] %s50
      %56 = dma.hbm_to_vmem [thread:$0]  %s5, 1024, %s51, [#allocation7], 64, 64, 4
    $region25: #{tpu_custom_call.1} parent=1 // pred_fallthru
      _
    // Predicated region
    $region26: #{tpu_custom_call.1} parent=1 // pred_check
      _
    $region27: #{tpu_custom_call.1} parent=1 // pred_check_branch
      %58 = sbr.rel (0) target = $region29
    $region28: #{tpu_custom_call.1} parent=1 // pred_region
      _
    $region29: #{tpu_custom_call.1} parent=1 // pred_fallthru
      _
    // Predicated region
    $region30: #{tpu_custom_call.1} parent=1 // pred_check
      _
    $region31: #{tpu_custom_call.1} parent=1 // pred_check_branch
      %60 = sbr.rel (0) target = $region33
    $region32: #{tpu_custom_call.1} parent=1 // pred_region
      %61 = dma.done [#allocation4], 512
    $region33: #{tpu_custom_call.1} parent=1 // pred_fallthru
      _
    // Predicated region
    $region34: #{tpu_custom_call.1} parent=1 // pred_check
      _
    $region35: #{tpu_custom_call.1} parent=1 // pred_check_branch
      %63 = sbr.rel (0) target = $region37
    $region36: #{tpu_custom_call.1} parent=1 // pred_region
      %64 = dma.done [#allocation7], 1024
    $region37: #{tpu_custom_call.1} parent=1 // pred_fallthru
      _
    // Predicated region
    $region38: #{tpu_custom_call.1} parent=1 // pred_check
      _
    $region39: #{tpu_custom_call.1} parent=1 // pred_check_branch
      %66 = sbr.rel (0) target = $region41
    $region40: #{tpu_custom_call.1} parent=1 // pred_region
      %67 = dma.done [#allocation7], 1024
    $region41: #{tpu_custom_call.1} parent=1 // pred_fallthru
      _
    %p69 = scmp.eq.s32.totalorder 0, 0
    // Predicated region
    $region42: #{tpu_custom_call.1} parent=1 // pred_check
      %p70 = pneg %p69
    $region43: #{tpu_custom_call.1} parent=1 // pred_check_branch
      %72 = sbr.rel (%p70) target = $region45
    $region44: #{tpu_custom_call.1} parent=1 // pred_region
      %73 = vst [vmem:[#allocation2] sm:$0xff] 0.0
      %74 = vst [vmem:[#allocation2 + $0x8] sm:$0xff] 0.0
      %75 = vst [vmem:[#allocation2 + $0x10] sm:$0xff] 0.0
      %76 = vst [vmem:[#allocation2 + $0x18] sm:$0xff] 0.0
      %77 = vst [vmem:[#allocation2 + $0x20] sm:$0xff] 0.0
      %78 = vst [vmem:[#allocation2 + $0x28] sm:$0xff] 0.0
      %79 = vst [vmem:[#allocation2 + $0x30] sm:$0xff] 0.0
      %80 = vst [vmem:[#allocation2 + $0x38] sm:$0xff] 0.0
      %81 = vst [vmem:[#allocation2 + $0x40] sm:$0xff] 0.0
      %82 = vst [vmem:[#allocation2 + $0x48] sm:$0xff] 0.0
      %83 = vst [vmem:[#allocation2 + $0x50] sm:$0xff] 0.0
      %84 = vst [vmem:[#allocation2 + $0x58] sm:$0xff] 0.0
      %85 = vst [vmem:[#allocation2 + $0x60] sm:$0xff] 0.0
      %86 = vst [vmem:[#allocation2 + $0x68] sm:$0xff] 0.0
      %87 = vst [vmem:[#allocation2 + $0x70] sm:$0xff] 0.0
      %88 = vst [vmem:[#allocation2 + $0x78] sm:$0xff] 0.0
    $region45: #{tpu_custom_call.1} parent=1 // pred_fallthru
      _
    %v89 = vld [vmem:[#allocation3] sm:$0xff]
    %v90 = vld [vmem:[#allocation3 + $0x8] sm:$0xff]
    %v91 = vld [vmem:[#allocation3 + $0x10] sm:$0xff]
    %v92 = vld [vmem:[#allocation3 + $0x18] sm:$0xff]
    %v93 = vunpack.c.l.s8.bf16 %v89
    %v94 = vunpack.c.h.s8.bf16 %v89
    %v95 = vunpack.c.l.s8.bf16 %v90
    %v96 = vunpack.c.h.s8.bf16 %v90
    %v97 = vunpack.c.l.s8.bf16 %v91
    %v98 = vunpack.c.h.s8.bf16 %v91
    %v99 = vunpack.c.l.s8.bf16 %v92
    %v100 = vunpack.c.h.s8.bf16 %v92
    %v101 = vld [vmem:[%s1] sm:$0xf]
    %v102 = vld [vmem:[%s1 + $0x4] sm:$0xf]
    %v103 = vld [vmem:[%s1 + $0x8] sm:$0xf]
    %v104 = vld [vmem:[%s1 + $0xc] sm:$0xf]
    %v105 = vld [vmem:[%s1 + $0x10] sm:$0xf]
    %v106 = vld [vmem:[%s1 + $0x14] sm:$0xf]
    %v107 = vld [vmem:[%s1 + $0x18] sm:$0xf]
    %v108 = vld [vmem:[%s1 + $0x1c] sm:$0xf]
    %v109 = vld [vmem:[%s1 + $0x20] sm:$0xf]
    %v110 = vld [vmem:[%s1 + $0x24] sm:$0xf]
    %v111 = vld [vmem:[%s1 + $0x28] sm:$0xf]
    %v112 = vld [vmem:[%s1 + $0x2c] sm:$0xf]
    %v113 = vld [vmem:[%s1 + $0x30] sm:$0xf]
    %v114 = vld [vmem:[%s1 + $0x34] sm:$0xf]
    %v115 = vld [vmem:[%s1 + $0x38] sm:$0xf]
    %v116 = vld [vmem:[%s1 + $0x3c] sm:$0xf]
    %v117 = vld [vmem:[#allocation2] sm:$0xff]
    %v118 = vld [vmem:[#allocation2 + $0x8] sm:$0xff]
    %v119 = vld [vmem:[#allocation2 + $0x10] sm:$0xff]
    %v120 = vld [vmem:[#allocation2 + $0x18] sm:$0xff]
    %v121 = vld [vmem:[#allocation2 + $0x20] sm:$0xff]
    %v122 = vld [vmem:[#allocation2 + $0x28] sm:$0xff]
    %v123 = vld [vmem:[#allocation2 + $0x30] sm:$0xff]
    %v124 = vld [vmem:[#allocation2 + $0x38] sm:$0xff]
    %v125 = vld [vmem:[#allocation2 + $0x40] sm:$0xff]
    %v126 = vld [vmem:[#allocation2 + $0x48] sm:$0xff]
    %v127 = vld [vmem:[#allocation2 + $0x50] sm:$0xff]
    %v128 = vld [vmem:[#allocation2 + $0x58] sm:$0xff]
    %v129 = vld [vmem:[#allocation2 + $0x60] sm:$0xff]
    %v130 = vld [vmem:[#allocation2 + $0x68] sm:$0xff]
    %v131 = vld [vmem:[#allocation2 + $0x70] sm:$0xff]
    %v132 = vld [vmem:[#allocation2 + $0x78] sm:$0xff]
    %v149 = vunpack.c.l.b16 %v101
    %v150 = vunpack.c.l.b16 %v102
    %v151 = vunpack.c.l.b16 %v103
    %v152 = vunpack.c.l.b16 %v104
    %v153 = vunpack.c.l.b16 %v105
    %v154 = vunpack.c.l.b16 %v106
    %v155 = vunpack.c.l.b16 %v107
    %v156 = vunpack.c.l.b16 %v108
    %v157 = vunpack.c.l.b16 %v109
    %v158 = vunpack.c.l.b16 %v110
    %v159 = vunpack.c.l.b16 %v111
    %v160 = vunpack.c.l.b16 %v112
    %v161 = vunpack.c.l.b16 %v113
    %v162 = vunpack.c.l.b16 %v114
    %v163 = vunpack.c.l.b16 %v115
    %v164 = vunpack.c.l.b16 %v116
    %v165 = vpack.c.b16 %v150, %v149
    %v166 = vpack.c.b16 %v152, %v151
    %v167 = vpack.c.b16 %v154, %v153
    %v168 = vpack.c.b16 %v156, %v155
    %v169 = vpack.c.b16 %v158, %v157
    %v170 = vpack.c.b16 %v160, %v159
    %v171 = vpack.c.b16 %v162, %v161
    %v172 = vpack.c.b16 %v164, %v163
    %181 = vmatprep.subr.bf16.mxu0 0
    %182 = vmatpush1.bf16.msra.mxu0 %v165
    %183 = vmatprep.subr.bf16.mxu0 0
    %184 = vmatpush1.bf16.msra.mxu0 %v166
    %185 = vmatprep.subr.bf16.mxu0 0
    %186 = vmatpush1.bf16.msra.mxu0 %v167
    %187 = vmatprep.subr.bf16.mxu0 0
    %188 = vmatpush1.bf16.msra.mxu0 %v168
    %189 = vmatprep.subr.bf16.mxu0 0
    %190 = vmatpush1.bf16.msra.mxu0 %v169
    %191 = vmatprep.subr.bf16.mxu0 0
    %192 = vmatpush1.bf16.msra.mxu0 %v170
    %193 = vmatprep.subr.bf16.mxu0 0
    %194 = vmatpush1.bf16.msra.mxu0 %v171
    %195 = vmatprep.subr.bf16.mxu0 0
    %196 = vmatpush1.bf16.msra.mxu0 %v172
    %197 = vmatprep.subr.bf16.mxu0 0
    %198 = vmatpush1.bf16.msra.mxu0 0
    %199 = vmatprep.subr.bf16.mxu0 0
    %200 = vmatpush1.bf16.msra.mxu0 0
    %201 = vmatprep.subr.bf16.mxu0 0
    %202 = vmatpush1.bf16.msra.mxu0 0
    %203 = vmatprep.subr.bf16.mxu0 0
    %204 = vmatpush1.bf16.msra.mxu0 0
    %205 = vmatprep.subr.bf16.mxu0 0
    %206 = vmatpush1.bf16.msra.mxu0 0
    %207 = vmatprep.subr.bf16.mxu0 0
    %208 = vmatpush1.bf16.msra.mxu0 0
    %209 = vmatprep.subr.bf16.mxu0 0
    %210 = vmatpush1.bf16.msra.mxu0 0
    %211 = vmatprep.subr.bf16.mxu0 0
    %212 = vmatpush1.bf16.msra.mxu0 0
    %213 = vmatprep.mubr.bf16.mxu0 0
    %214 = vmatmul.mubr.bf16.gmra.mrb[0].mxu0 %v93
    %v215 = vpop.f32.mrb[0].mxu0
    %v216 = vadd.f32 0.0, %v215
    %v217 = vpop.f32.mrb[0].mxu0
    %v218 = vpop.f32.mrb[0].mxu0
    %v219 = vadd.f32 0.0, %v218
    %v220 = vpop.f32.mrb[0].mxu0
    %221 = vmatprep.mubr.bf16.mxu0 0
    %222 = vmatmul.mubr.bf16.gmra.mrb[0].mxu0 %v94
    %v223 = vpop.f32.mrb[0].mxu0
    %v224 = vadd.f32 0.0, %v223
    %v225 = vpop.f32.mrb[0].mxu0
    %v226 = vpop.f32.mrb[0].mxu0
    %v227 = vadd.f32 0.0, %v226
    %v228 = vpop.f32.mrb[0].mxu0
    %229 = vmatprep.mubr.bf16.mxu0 0
    %230 = vmatmul.mubr.bf16.gmra.mrb[0].mxu0 %v95
    %v231 = vpop.f32.mrb[0].mxu0
    %v232 = vadd.f32 0.0, %v231
    %v233 = vpop.f32.mrb[0].mxu0
    %v234 = vpop.f32.mrb[0].mxu0
    %v235 = vadd.f32 0.0, %v234
    %v236 = vpop.f32.mrb[0].mxu0
    %237 = vmatprep.mubr.bf16.mxu0 0
    %238 = vmatmul.mubr.bf16.gmra.mrb[0].mxu0 %v96
    %v239 = vpop.f32.mrb[0].mxu0
    %v240 = vadd.f32 0.0, %v239
    %v241 = vpop.f32.mrb[0].mxu0
    %v242 = vpop.f32.mrb[0].mxu0
    %v243 = vadd.f32 0.0, %v242
    %v244 = vpop.f32.mrb[0].mxu0
    %245 = vmatprep.mubr.bf16.mxu0 0
    %246 = vmatmul.mubr.bf16.gmra.mrb[0].mxu0 %v97
    %v247 = vpop.f32.mrb[0].mxu0
    %v248 = vadd.f32 0.0, %v247
    %v249 = vpop.f32.mrb[0].mxu0
    %v250 = vpop.f32.mrb[0].mxu0
    %v251 = vadd.f32 0.0, %v250
    %v252 = vpop.f32.mrb[0].mxu0
    %253 = vmatprep.mubr.bf16.mxu0 0
    %254 = vmatmul.mubr.bf16.gmra.mrb[0].mxu0 %v98
    %v255 = vpop.f32.mrb[0].mxu0
    %v256 = vadd.f32 0.0, %v255
    %v257 = vpop.f32.mrb[0].mxu0
    %v258 = vpop.f32.mrb[0].mxu0
    %v259 = vadd.f32 0.0, %v258
    %v260 = vpop.f32.mrb[0].mxu0
    %261 = vmatprep.mubr.bf16.mxu0 0
    %262 = vmatmul.mubr.bf16.gmra.mrb[0].mxu0 %v99
    %v263 = vpop.f32.mrb[0].mxu0
    %v264 = vadd.f32 0.0, %v263
    %v265 = vpop.f32.mrb[0].mxu0
    %v266 = vpop.f32.mrb[0].mxu0
    %v267 = vadd.f32 0.0, %v266
    %v268 = vpop.f32.mrb[0].mxu0
    %269 = vmatprep.mubr.bf16.mxu0 0
    %270 = vmatmul.mubr.bf16.gmra.mrb[0].mxu0 %v100
    %v271 = vpop.f32.mrb[0].mxu0
    %v272 = vadd.f32 0.0, %v271
    %v273 = vpop.f32.mrb[0].mxu0
    %v274 = vpop.f32.mrb[0].mxu0
    %v275 = vadd.f32 0.0, %v274
    %v276 = vpop.f32.mrb[0].mxu0
    %277 = vdwg.mxu0
    %v278 = vadd.f32 %v117, %v216
    %v279 = vadd.f32 %v118, %v219
    %v280 = vadd.f32 %v119, %v224
    %v281 = vadd.f32 %v120, %v227
    %v282 = vadd.f32 %v121, %v232
    %v283 = vadd.f32 %v122, %v235
    %v284 = vadd.f32 %v123, %v240
    %v285 = vadd.f32 %v124, %v243
    %v286 = vadd.f32 %v125, %v248
    %v287 = vadd.f32 %v126, %v251
    %v288 = vadd.f32 %v127, %v256
    %v289 = vadd.f32 %v128, %v259
    %v290 = vadd.f32 %v129, %v264
    %v291 = vadd.f32 %v130, %v267
    %v292 = vadd.f32 %v131, %v272
    %v293 = vadd.f32 %v132, %v275
    %294 = vst [vmem:[#allocation2] sm:$0xff] %v278
    %295 = vst [vmem:[#allocation2 + $0x8] sm:$0xff] %v279
    %296 = vst [vmem:[#allocation2 + $0x10] sm:$0xff] %v280
    %297 = vst [vmem:[#allocation2 + $0x18] sm:$0xff] %v281
    %298 = vst [vmem:[#allocation2 + $0x20] sm:$0xff] %v282
    %299 = vst [vmem:[#allocation2 + $0x28] sm:$0xff] %v283
    %300 = vst [vmem:[#allocation2 + $0x30] sm:$0xff] %v284
    %301 = vst [vmem:[#allocation2 + $0x38] sm:$0xff] %v285
    %302 = vst [vmem:[#allocation2 + $0x40] sm:$0xff] %v286
    %303 = vst [vmem:[#allocation2 + $0x48] sm:$0xff] %v287
    %304 = vst [vmem:[#allocation2 + $0x50] sm:$0xff] %v288
    %305 = vst [vmem:[#allocation2 + $0x58] sm:$0xff] %v289
    %306 = vst [vmem:[#allocation2 + $0x60] sm:$0xff] %v290
    %307 = vst [vmem:[#allocation2 + $0x68] sm:$0xff] %v291
    %308 = vst [vmem:[#allocation2 + $0x70] sm:$0xff] %v292
    %309 = vst [vmem:[#allocation2 + $0x78] sm:$0xff] %v293
    // Predicated region
    $region46: #{tpu_custom_call.1} parent=1 // pred_check
      %p310 = pneg %p69
    $region47: #{tpu_custom_call.1} parent=1 // pred_check_branch
      %312 = sbr.rel (%p310) target = $region49
    $region48: #{tpu_custom_call.1} parent=1 // pred_region
      %v313 = vld [vmem:[%s3] sm:$0xff]
      %v314 = vld [vmem:[%s3 + $0x8] sm:$0xff]
      %v315 = vld [vmem:[%s3 + $0x10] sm:$0xff]
      %v316 = vld [vmem:[%s3 + $0x18] sm:$0xff]
      %v317 = vld [vmem:[%s3 + $0x20] sm:$0xff]
      %v318 = vld [vmem:[%s3 + $0x28] sm:$0xff]
      %v319 = vld [vmem:[%s3 + $0x30] sm:$0xff]
      %v320 = vld [vmem:[%s3 + $0x38] sm:$0xff]
      %v321 = vld [vmem:[%s3 + $0x40] sm:$0xff]
      %v322 = vld [vmem:[%s3 + $0x48] sm:$0xff]
      %v323 = vld [vmem:[%s3 + $0x50] sm:$0xff]
      %v324 = vld [vmem:[%s3 + $0x58] sm:$0xff]
      %v325 = vld [vmem:[%s3 + $0x60] sm:$0xff]
      %v326 = vld [vmem:[%s3 + $0x68] sm:$0xff]
      %v327 = vld [vmem:[%s3 + $0x70] sm:$0xff]
      %v328 = vld [vmem:[%s3 + $0x78] sm:$0xff]
      %v329 = vld [vmem:[#allocation2] sm:$0xff]
      %v330 = vld [vmem:[#allocation2 + $0x8] sm:$0xff]
      %v331 = vld [vmem:[#allocation2 + $0x10] sm:$0xff]
      %v332 = vld [vmem:[#allocation2 + $0x18] sm:$0xff]
      %v333 = vld [vmem:[#allocation2 + $0x20] sm:$0xff]
      %v334 = vld [vmem:[#allocation2 + $0x28] sm:$0xff]
      %v335 = vld [vmem:[#allocation2 + $0x30] sm:$0xff]
      %v336 = vld [vmem:[#allocation2 + $0x38] sm:$0xff]
      %v337 = vld [vmem:[#allocation2 + $0x40] sm:$0xff]
      %v338 = vld [vmem:[#allocation2 + $0x48] sm:$0xff]
      %v339 = vld [vmem:[#allocation2 + $0x50] sm:$0xff]
      %v340 = vld [vmem:[#allocation2 + $0x58] sm:$0xff]
      %v341 = vld [vmem:[#allocation2 + $0x60] sm:$0xff]
      %v342 = vld [vmem:[#allocation2 + $0x68] sm:$0xff]
      %v343 = vld [vmem:[#allocation2 + $0x70] sm:$0xff]
      %v344 = vld [vmem:[#allocation2 + $0x78] sm:$0xff]
      %346 = vset.pattern.permute.xlu0 0
      %347 = vperm.xlu0 %346, %v313
      %v348 = vpop.permute.xlu0 %347
      %351 = vset.pattern.permute.xlu0 0
      %352 = vperm.xlu0 %351, %v314
      %v353 = vpop.permute.xlu0 %352
      %356 = vset.pattern.permute.xlu0 0
      %357 = vperm.xlu0 %356, %v315
      %v358 = vpop.permute.xlu0 %357
      %361 = vset.pattern.permute.xlu0 0
      %362 = vperm.xlu0 %361, %v316
      %v363 = vpop.permute.xlu0 %362
      %366 = vset.pattern.permute.xlu0 0
      %367 = vperm.xlu0 %366, %v317
      %v368 = vpop.permute.xlu0 %367
      %371 = vset.pattern.permute.xlu0 0
      %372 = vperm.xlu0 %371, %v318
      %v373 = vpop.permute.xlu0 %372
      %376 = vset.pattern.permute.xlu0 0
      %377 = vperm.xlu0 %376, %v319
      %v378 = vpop.permute.xlu0 %377
      %381 = vset.pattern.permute.xlu0 0
      %382 = vperm.xlu0 %381, %v320
      %v383 = vpop.permute.xlu0 %382
      %386 = vset.pattern.permute.xlu0 0
      %387 = vperm.xlu0 %386, %v321
      %v388 = vpop.permute.xlu0 %387
      %391 = vset.pattern.permute.xlu0 0
      %392 = vperm.xlu0 %391, %v322
      %v393 = vpop.permute.xlu0 %392
      %396 = vset.pattern.permute.xlu0 0
      %397 = vperm.xlu0 %396, %v323
      %v398 = vpop.permute.xlu0 %397
      %401 = vset.pattern.permute.xlu0 0
      %402 = vperm.xlu0 %401, %v324
      %v403 = vpop.permute.xlu0 %402
      %406 = vset.pattern.permute.xlu0 0
      %407 = vperm.xlu0 %406, %v325
      %v408 = vpop.permute.xlu0 %407
      %411 = vset.pattern.permute.xlu0 0
      %412 = vperm.xlu0 %411, %v326
      %v413 = vpop.permute.xlu0 %412
      %416 = vset.pattern.permute.xlu0 0
      %417 = vperm.xlu0 %416, %v327
      %v418 = vpop.permute.xlu0 %417
      %421 = vset.pattern.permute.xlu0 0
      %422 = vperm.xlu0 %421, %v328
      %v423 = vpop.permute.xlu0 %422
      %v425 = vmul.f32 %v329, %v348
      %v426 = vmul.f32 %v330, %v353
      %v427 = vmul.f32 %v331, %v358
      %v428 = vmul.f32 %v332, %v363
      %v429 = vmul.f32 %v333, %v368
      %v430 = vmul.f32 %v334, %v373
      %v431 = vmul.f32 %v335, %v378
      %v432 = vmul.f32 %v336, %v383
      %v433 = vmul.f32 %v337, %v388
      %v434 = vmul.f32 %v338, %v393
      %v435 = vmul.f32 %v339, %v398
      %v436 = vmul.f32 %v340, %v403
      %v437 = vmul.f32 %v341, %v408
      %v438 = vmul.f32 %v342, %v413
      %v439 = vmul.f32 %v343, %v418
      %v440 = vmul.f32 %v344, %v423
      %v441 = vpack.c.bf16 %v426, %v425
      %v442 = vpack.c.bf16 %v428, %v427
      %v443 = vpack.c.bf16 %v430, %v429
      %v444 = vpack.c.bf16 %v432, %v431
      %v445 = vpack.c.bf16 %v434, %v433
      %v446 = vpack.c.bf16 %v436, %v435
      %v447 = vpack.c.bf16 %v438, %v437
      %v448 = vpack.c.bf16 %v440, %v439
      %v449 = vld [vmem:[#allocation6] sm:$0xf]
      %v450 = vld [vmem:[#allocation6 + $0x4] sm:$0xf]
      %v451 = vld [vmem:[#allocation6 + $0x8] sm:$0xf]
      %v452 = vld [vmem:[#allocation6 + $0xc] sm:$0xf]
      %v453 = vld [vmem:[#allocation6 + $0x10] sm:$0xf]
      %v454 = vld [vmem:[#allocation6 + $0x14] sm:$0xf]
      %v455 = vld [vmem:[#allocation6 + $0x18] sm:$0xf]
      %v456 = vld [vmem:[#allocation6 + $0x1c] sm:$0xf]
      %v457 = vld [vmem:[#allocation6 + $0x20] sm:$0xf]
      %v458 = vld [vmem:[#allocation6 + $0x24] sm:$0xf]
      %v459 = vld [vmem:[#allocation6 + $0x28] sm:$0xf]
      %v460 = vld [vmem:[#allocation6 + $0x2c] sm:$0xf]
      %v461 = vld [vmem:[#allocation6 + $0x30] sm:$0xf]
      %v462 = vld [vmem:[#allocation6 + $0x34] sm:$0xf]
      %v463 = vld [vmem:[#allocation6 + $0x38] sm:$0xf]
      %v464 = vld [vmem:[#allocation6 + $0x3c] sm:$0xf]
      %v465 = vld [vmem:[%s2] sm:$0xf]
      %v466 = vld [vmem:[%s2 + $0x4] sm:$0xf]
      %v467 = vld [vmem:[%s2 + $0x8] sm:$0xf]
      %v468 = vld [vmem:[%s2 + $0xc] sm:$0xf]
      %v469 = vld [vmem:[%s2 + $0x10] sm:$0xf]
      %v470 = vld [vmem:[%s2 + $0x14] sm:$0xf]
      %v471 = vld [vmem:[%s2 + $0x18] sm:$0xf]
      %v472 = vld [vmem:[%s2 + $0x1c] sm:$0xf]
      %v473 = vld [vmem:[%s2 + $0x20] sm:$0xf]
      %v474 = vld [vmem:[%s2 + $0x24] sm:$0xf]
      %v475 = vld [vmem:[%s2 + $0x28] sm:$0xf]
      %v476 = vld [vmem:[%s2 + $0x2c] sm:$0xf]
      %v477 = vld [vmem:[%s2 + $0x30] sm:$0xf]
      %v478 = vld [vmem:[%s2 + $0x34] sm:$0xf]
      %v479 = vld [vmem:[%s2 + $0x38] sm:$0xf]
      %v480 = vld [vmem:[%s2 + $0x3c] sm:$0xf]
      %v481 = vld [vmem:[#allocation8] sm:$0xf]
      %v482 = vld [vmem:[#allocation8 + $0x4] sm:$0xf]
      %v483 = vld [vmem:[#allocation8 + $0x8] sm:$0xf]
      %v484 = vld [vmem:[#allocation8 + $0xc] sm:$0xf]
      %v485 = vld [vmem:[#allocation8 + $0x10] sm:$0xf]
      %v486 = vld [vmem:[#allocation8 + $0x14] sm:$0xf]
      %v487 = vld [vmem:[#allocation8 + $0x18] sm:$0xf]
      %v488 = vld [vmem:[#allocation8 + $0x1c] sm:$0xf]
      %v489 = vld [vmem:[#allocation8 + $0x20] sm:$0xf]
      %v490 = vld [vmem:[#allocation8 + $0x24] sm:$0xf]
      %v491 = vld [vmem:[#allocation8 + $0x28] sm:$0xf]
      %v492 = vld [vmem:[#allocation8 + $0x2c] sm:$0xf]
      %v493 = vld [vmem:[#allocation8 + $0x30] sm:$0xf]
      %v494 = vld [vmem:[#allocation8 + $0x34] sm:$0xf]
      %v495 = vld [vmem:[#allocation8 + $0x38] sm:$0xf]
      %v496 = vld [vmem:[#allocation8 + $0x3c] sm:$0xf]
      %v513 = vunpack.c.l.b16 %v465
      %v514 = vunpack.c.l.b16 %v466
      %v515 = vunpack.c.l.b16 %v467
      %v516 = vunpack.c.l.b16 %v468
      %v517 = vunpack.c.l.b16 %v469
      %v518 = vunpack.c.l.b16 %v470
      %v519 = vunpack.c.l.b16 %v471
      %v520 = vunpack.c.l.b16 %v472
      %v521 = vunpack.c.l.b16 %v473
      %v522 = vunpack.c.l.b16 %v474
      %v523 = vunpack.c.l.b16 %v475
      %v524 = vunpack.c.l.b16 %v476
      %v525 = vunpack.c.l.b16 %v477
      %v526 = vunpack.c.l.b16 %v478
      %v527 = vunpack.c.l.b16 %v479
      %v528 = vunpack.c.l.b16 %v480
      %v529 = vpack.c.b16 %v514, %v513
      %v530 = vpack.c.b16 %v516, %v515
      %v531 = vpack.c.b16 %v518, %v517
      %v532 = vpack.c.b16 %v520, %v519
      %v533 = vpack.c.b16 %v522, %v521
      %v534 = vpack.c.b16 %v524, %v523
      %v535 = vpack.c.b16 %v526, %v525
      %v536 = vpack.c.b16 %v528, %v527
      %v561 = vunpack.c.l.b16 %v481
      %v562 = vunpack.c.l.b16 %v482
      %v563 = vunpack.c.l.b16 %v483
      %v564 = vunpack.c.l.b16 %v484
      %v565 = vunpack.c.l.b16 %v485
      %v566 = vunpack.c.l.b16 %v486
      %v567 = vunpack.c.l.b16 %v487
      %v568 = vunpack.c.l.b16 %v488
      %v569 = vunpack.c.l.b16 %v489
      %v570 = vunpack.c.l.b16 %v490
      %v571 = vunpack.c.l.b16 %v491
      %v572 = vunpack.c.l.b16 %v492
      %v573 = vunpack.c.l.b16 %v493
      %v574 = vunpack.c.l.b16 %v494
      %v575 = vunpack.c.l.b16 %v495
      %v576 = vunpack.c.l.b16 %v496
      %v577 = vpack.c.b16 %v562, %v561
      %v578 = vpack.c.b16 %v564, %v563
      %v579 = vpack.c.b16 %v566, %v565
      %v580 = vpack.c.b16 %v568, %v567
      %v581 = vpack.c.b16 %v570, %v569
      %v582 = vpack.c.b16 %v572, %v571
      %v583 = vpack.c.b16 %v574, %v573
      %v584 = vpack.c.b16 %v576, %v575
      %593 = vmatprep.subr.bf16.mxu0 0
      %594 = vmatpush1.bf16.msra.mxu0 %v577
      %595 = vmatprep.subr.bf16.mxu0 0
      %596 = vmatpush1.bf16.msra.mxu0 %v578
      %597 = vmatprep.subr.bf16.mxu0 0
      %598 = vmatpush1.bf16.msra.mxu0 %v579
      %599 = vmatprep.subr.bf16.mxu0 0
      %600 = vmatpush1.bf16.msra.mxu0 %v580
      %601 = vmatprep.subr.bf16.mxu0 0
      %602 = vmatpush1.bf16.msra.mxu0 %v581
      %603 = vmatprep.subr.bf16.mxu0 0
      %604 = vmatpush1.bf16.msra.mxu0 %v582
      %605 = vmatprep.subr.bf16.mxu0 0
      %606 = vmatpush1.bf16.msra.mxu0 %v583
      %607 = vmatprep.subr.bf16.mxu0 0
      %608 = vmatpush1.bf16.msra.mxu0 %v584
      %609 = vmatprep.subr.bf16.mxu0 0
      %610 = vmatpush1.bf16.msra.mxu0 0
      %611 = vmatprep.subr.bf16.mxu0 0
      %612 = vmatpush1.bf16.msra.mxu0 0
      %613 = vmatprep.subr.bf16.mxu0 0
      %614 = vmatpush1.bf16.msra.mxu0 0
      %615 = vmatprep.subr.bf16.mxu0 0
      %616 = vmatpush1.bf16.msra.mxu0 0
      %617 = vmatprep.subr.bf16.mxu0 0
      %618 = vmatpush1.bf16.msra.mxu0 0
      %619 = vmatprep.subr.bf16.mxu0 0
      %620 = vmatpush1.bf16.msra.mxu0 0
      %621 = vmatprep.subr.bf16.mxu0 0
      %622 = vmatpush1.bf16.msra.mxu0 0
      %623 = vmatprep.subr.bf16.mxu0 0
      %624 = vmatpush1.bf16.msra.mxu0 0
      %625 = vmatprep.mubr.bf16.mxu0 0
      %626 = vmatmul.mubr.bf16.gmra.mrb[0].mxu0 %v529
      %v627 = vpop.f32.mrb[0].mxu0
      %v628 = vadd.f32 0.0, %v627
      %v629 = vpop.f32.mrb[0].mxu0
      %v630 = vpop.f32.mrb[0].mxu0
      %v631 = vadd.f32 0.0, %v630
      %v632 = vpop.f32.mrb[0].mxu0
      %633 = vmatprep.mubr.bf16.mxu0 0
      %634 = vmatmul.mubr.bf16.gmra.mrb[0].mxu0 %v530
      %v635 = vpop.f32.mrb[0].mxu0
      %v636 = vadd.f32 0.0, %v635
      %v637 = vpop.f32.mrb[0].mxu0
      %v638 = vpop.f32.mrb[0].mxu0
      %v639 = vadd.f32 0.0, %v638
      %v640 = vpop.f32.mrb[0].mxu0
      %641 = vmatprep.mubr.bf16.mxu0 0
      %642 = vmatmul.mubr.bf16.gmra.mrb[0].mxu0 %v531
      %v643 = vpop.f32.mrb[0].mxu0
      %v644 = vadd.f32 0.0, %v643
      %v645 = vpop.f32.mrb[0].mxu0
      %v646 = vpop.f32.mrb[0].mxu0
      %v647 = vadd.f32 0.0, %v646
      %v648 = vpop.f32.mrb[0].mxu0
      %649 = vmatprep.mubr.bf16.mxu0 0
      %650 = vmatmul.mubr.bf16.gmra.mrb[0].mxu0 %v532
      %v651 = vpop.f32.mrb[0].mxu0
      %v652 = vadd.f32 0.0, %v651
      %v653 = vpop.f32.mrb[0].mxu0
      %v654 = vpop.f32.mrb[0].mxu0
      %v655 = vadd.f32 0.0, %v654
      %v656 = vpop.f32.mrb[0].mxu0
      %657 = vmatprep.mubr.bf16.mxu0 0
      %658 = vmatmul.mubr.bf16.gmra.mrb[0].mxu0 %v533
      %v659 = vpop.f32.mrb[0].mxu0
      %v660 = vadd.f32 0.0, %v659
      %v661 = vpop.f32.mrb[0].mxu0
      %v662 = vpop.f32.mrb[0].mxu0
      %v663 = vadd.f32 0.0, %v662
      %v664 = vpop.f32.mrb[0].mxu0
      %665 = vmatprep.mubr.bf16.mxu0 0
      %666 = vmatmul.mubr.bf16.gmra.mrb[0].mxu0 %v534
      %v667 = vpop.f32.mrb[0].mxu0
      %v668 = vadd.f32 0.0, %v667
      %v669 = vpop.f32.mrb[0].mxu0
      %v670 = vpop.f32.mrb[0].mxu0
      %v671 = vadd.f32 0.0, %v670
      %v672 = vpop.f32.mrb[0].mxu0
      %673 = vmatprep.mubr.bf16.mxu0 0
      %674 = vmatmul.mubr.bf16.gmra.mrb[0].mxu0 %v535
      %v675 = vpop.f32.mrb[0].mxu0
      %v676 = vadd.f32 0.0, %v675
      %v677 = vpop.f32.mrb[0].mxu0
      %v678 = vpop.f32.mrb[0].mxu0
      %v679 = vadd.f32 0.0, %v678
      %v680 = vpop.f32.mrb[0].mxu0
      %681 = vmatprep.mubr.bf16.mxu0 0
      %682 = vmatmul.mubr.bf16.gmra.mrb[0].mxu0 %v536
      %v683 = vpop.f32.mrb[0].mxu0
      %v684 = vadd.f32 0.0, %v683
      %v685 = vpop.f32.mrb[0].mxu0
      %v686 = vpop.f32.mrb[0].mxu0
      %v687 = vadd.f32 0.0, %v686
      %v688 = vpop.f32.mrb[0].mxu0
      %689 = vdwg.mxu0
      %v706 = vunpack.c.l.b16 %v449
      %v707 = vunpack.c.l.b16 %v450
      %v708 = vunpack.c.l.b16 %v451
      %v709 = vunpack.c.l.b16 %v452
      %v710 = vunpack.c.l.b16 %v453
      %v711 = vunpack.c.l.b16 %v454
      %v712 = vunpack.c.l.b16 %v455
      %v713 = vunpack.c.l.b16 %v456
      %v714 = vunpack.c.l.b16 %v457
      %v715 = vunpack.c.l.b16 %v458
      %v716 = vunpack.c.l.b16 %v459
      %v717 = vunpack.c.l.b16 %v460
      %v718 = vunpack.c.l.b16 %v461
      %v719 = vunpack.c.l.b16 %v462
      %v720 = vunpack.c.l.b16 %v463
      %v721 = vunpack.c.l.b16 %v464
      %v722 = vpack.c.b16 %v707, %v706
      %v723 = vpack.c.b16 %v709, %v708
      %v724 = vpack.c.b16 %v711, %v710
      %v725 = vpack.c.b16 %v713, %v712
      %v726 = vpack.c.b16 %v715, %v714
      %v727 = vpack.c.b16 %v717, %v716
      %v728 = vpack.c.b16 %v719, %v718
      %v729 = vpack.c.b16 %v721, %v720
      %738 = vmatprep.subr.bf16.mxu0 0
      %739 = vmatpush1.bf16.msra.mxu0 %v722
      %740 = vmatprep.subr.bf16.mxu0 0
      %741 = vmatpush1.bf16.msra.mxu0 %v723
      %742 = vmatprep.subr.bf16.mxu0 0
      %743 = vmatpush1.bf16.msra.mxu0 %v724
      %744 = vmatprep.subr.bf16.mxu0 0
      %745 = vmatpush1.bf16.msra.mxu0 %v725
      %746 = vmatprep.subr.bf16.mxu0 0
      %747 = vmatpush1.bf16.msra.mxu0 %v726
      %748 = vmatprep.subr.bf16.mxu0 0
      %749 = vmatpush1.bf16.msra.mxu0 %v727
      %750 = vmatprep.subr.bf16.mxu0 0
      %751 = vmatpush1.bf16.msra.mxu0 %v728
      %752 = vmatprep.subr.bf16.mxu0 0
      %753 = vmatpush1.bf16.msra.mxu0 %v729
      %754 = vmatprep.subr.bf16.mxu0 0
      %755 = vmatpush1.bf16.msra.mxu0 0
      %756 = vmatprep.subr.bf16.mxu0 0
      %757 = vmatpush1.bf16.msra.mxu0 0
      %758 = vmatprep.subr.bf16.mxu0 0
      %759 = vmatpush1.bf16.msra.mxu0 0
      %760 = vmatprep.subr.bf16.mxu0 0
      %761 = vmatpush1.bf16.msra.mxu0 0
      %762 = vmatprep.subr.bf16.mxu0 0
      %763 = vmatpush1.bf16.msra.mxu0 0
      %764 = vmatprep.subr.bf16.mxu0 0
      %765 = vmatpush1.bf16.msra.mxu0 0
      %766 = vmatprep.subr.bf16.mxu0 0
      %767 = vmatpush1.bf16.msra.mxu0 0
      %768 = vmatprep.subr.bf16.mxu0 0
      %769 = vmatpush1.bf16.msra.mxu0 0
      %770 = vmatprep.mubr.bf16.mxu0 0
      %771 = vmatmul.mubr.bf16.gmra.mrb[0].mxu0 %v441
      %v772 = vpop.f32.mrb[0].mxu0
      %v773 = vadd.f32 %v628, %v772
      %v774 = vpop.f32.mrb[0].mxu0
      %v775 = vpop.f32.mrb[0].mxu0
      %v776 = vadd.f32 %v631, %v775
      %v777 = vpop.f32.mrb[0].mxu0
      %778 = vmatprep.mubr.bf16.mxu0 0
      %779 = vmatmul.mubr.bf16.gmra.mrb[0].mxu0 %v442
      %v780 = vpop.f32.mrb[0].mxu0
      %v781 = vadd.f32 %v636, %v780
      %v782 = vpop.f32.mrb[0].mxu0
      %v783 = vpop.f32.mrb[0].mxu0
      %v784 = vadd.f32 %v639, %v783
      %v785 = vpop.f32.mrb[0].mxu0
      %786 = vmatprep.mubr.bf16.mxu0 0
      %787 = vmatmul.mubr.bf16.gmra.mrb[0].mxu0 %v443
      %v788 = vpop.f32.mrb[0].mxu0
      %v789 = vadd.f32 %v644, %v788
      %v790 = vpop.f32.mrb[0].mxu0
      %v791 = vpop.f32.mrb[0].mxu0
      %v792 = vadd.f32 %v647, %v791
      %v793 = vpop.f32.mrb[0].mxu0
      %794 = vmatprep.mubr.bf16.mxu0 0
      %795 = vmatmul.mubr.bf16.gmra.mrb[0].mxu0 %v444
      %v796 = vpop.f32.mrb[0].mxu0
      %v797 = vadd.f32 %v652, %v796
      %v798 = vpop.f32.mrb[0].mxu0
      %v799 = vpop.f32.mrb[0].mxu0
      %v800 = vadd.f32 %v655, %v799
      %v801 = vpop.f32.mrb[0].mxu0
      %802 = vmatprep.mubr.bf16.mxu0 0
      %803 = vmatmul.mubr.bf16.gmra.mrb[0].mxu0 %v445
      %v804 = vpop.f32.mrb[0].mxu0
      %v805 = vadd.f32 %v660, %v804
      %v806 = vpop.f32.mrb[0].mxu0
      %v807 = vpop.f32.mrb[0].mxu0
      %v808 = vadd.f32 %v663, %v807
      %v809 = vpop.f32.mrb[0].mxu0
      %810 = vmatprep.mubr.bf16.mxu0 0
      %811 = vmatmul.mubr.bf16.gmra.mrb[0].mxu0 %v446
      %v812 = vpop.f32.mrb[0].mxu0
      %v813 = vadd.f32 %v668, %v812
      %v814 = vpop.f32.mrb[0].mxu0
      %v815 = vpop.f32.mrb[0].mxu0
      %v816 = vadd.f32 %v671, %v815
      %v817 = vpop.f32.mrb[0].mxu0
      %818 = vmatprep.mubr.bf16.mxu0 0
      %819 = vmatmul.mubr.bf16.gmra.mrb[0].mxu0 %v447
      %v820 = vpop.f32.mrb[0].mxu0
      %v821 = vadd.f32 %v676, %v820
      %v822 = vpop.f32.mrb[0].mxu0
      %v823 = vpop.f32.mrb[0].mxu0
      %v824 = vadd.f32 %v679, %v823
      %v825 = vpop.f32.mrb[0].mxu0
      %826 = vmatprep.mubr.bf16.mxu0 0
      %827 = vmatmul.mubr.bf16.gmra.mrb[0].mxu0 %v448
      %v828 = vpop.f32.mrb[0].mxu0
      %v829 = vadd.f32 %v684, %v828
      %v830 = vpop.f32.mrb[0].mxu0
      %v831 = vpop.f32.mrb[0].mxu0
      %v832 = vadd.f32 %v687, %v831
      %v833 = vpop.f32.mrb[0].mxu0
      %834 = vdwg.mxu0
      %v835 = vld [vmem:[%s6] sm:$0x1]
      %v837 = vlaneseq
      %v838 = vshrl.u32 %v837, 7
      %v839 = vsub.s32 0, %v838
      %v840 = vrot.slane %v835, %v839
      %v842 = vadd.f32 %v773, %v840
      %v843 = vadd.f32 %v776, %v840
      %v844 = vadd.f32 %v781, %v840
      %v845 = vadd.f32 %v784, %v840
      %v846 = vadd.f32 %v789, %v840
      %v847 = vadd.f32 %v792, %v840
      %v848 = vadd.f32 %v797, %v840
      %v849 = vadd.f32 %v800, %v840
      %v850 = vadd.f32 %v805, %v840
      %v851 = vadd.f32 %v808, %v840
      %v852 = vadd.f32 %v813, %v840
      %v853 = vadd.f32 %v816, %v840
      %v854 = vadd.f32 %v821, %v840
      %v855 = vadd.f32 %v824, %v840
      %v856 = vadd.f32 %v829, %v840
      %v857 = vadd.f32 %v832, %v840
      %v858 = vmax.f32 %v842, 0.0
      %v859 = vmax.f32 %v843, 0.0
      %v860 = vmax.f32 %v844, 0.0
      %v861 = vmax.f32 %v845, 0.0
      %v862 = vmax.f32 %v846, 0.0
      %v863 = vmax.f32 %v847, 0.0
      %v864 = vmax.f32 %v848, 0.0
      %v865 = vmax.f32 %v849, 0.0
      %v866 = vmax.f32 %v850, 0.0
      %v867 = vmax.f32 %v851, 0.0
      %v868 = vmax.f32 %v852, 0.0
      %v869 = vmax.f32 %v853, 0.0
      %v870 = vmax.f32 %v854, 0.0
      %v871 = vmax.f32 %v855, 0.0
      %v872 = vmax.f32 %v856, 0.0
      %v873 = vmax.f32 %v857, 0.0
      %v874 = vpack.c.bf16 %v859, %v858
      %v875 = vpack.c.bf16 %v861, %v860
      %v876 = vpack.c.bf16 %v863, %v862
      %v877 = vpack.c.bf16 %v865, %v864
      %v878 = vpack.c.bf16 %v867, %v866
      %v879 = vpack.c.bf16 %v869, %v868
      %v880 = vpack.c.bf16 %v871, %v870
      %v881 = vpack.c.bf16 %v873, %v872
      %v890 = vunpack.c.l.b16 %v874
      %v891 = vunpack.c.h.b16 %v874
      %v892 = vunpack.c.l.b16 %v875
      %v893 = vunpack.c.h.b16 %v875
      %v894 = vunpack.c.l.b16 %v876
      %v895 = vunpack.c.h.b16 %v876
      %v896 = vunpack.c.l.b16 %v877
      %v897 = vunpack.c.h.b16 %v877
      %v898 = vunpack.c.l.b16 %v878
      %v899 = vunpack.c.h.b16 %v878
      %v900 = vunpack.c.l.b16 %v879
      %v901 = vunpack.c.h.b16 %v879
      %v902 = vunpack.c.l.b16 %v880
      %v903 = vunpack.c.h.b16 %v880
      %v904 = vunpack.c.l.b16 %v881
      %v905 = vunpack.c.h.b16 %v881
      %v906 = vpack.c.b16 %v890, %v890
      %v907 = vpack.c.b16 %v891, %v891
      %v908 = vpack.c.b16 %v892, %v892
      %v909 = vpack.c.b16 %v893, %v893
      %v910 = vpack.c.b16 %v894, %v894
      %v911 = vpack.c.b16 %v895, %v895
      %v912 = vpack.c.b16 %v896, %v896
      %v913 = vpack.c.b16 %v897, %v897
      %v914 = vpack.c.b16 %v898, %v898
      %v915 = vpack.c.b16 %v899, %v899
      %v916 = vpack.c.b16 %v900, %v900
      %v917 = vpack.c.b16 %v901, %v901
      %v918 = vpack.c.b16 %v902, %v902
      %v919 = vpack.c.b16 %v903, %v903
      %v920 = vpack.c.b16 %v904, %v904
      %v921 = vpack.c.b16 %v905, %v905
      %938 = vst [vmem:[#allocation9] sm:$0xf] %v906
      %939 = vst [vmem:[#allocation9 + $0x4] sm:$0xf] %v907
      %940 = vst [vmem:[#allocation9 + $0x8] sm:$0xf] %v908
      %941 = vst [vmem:[#allocation9 + $0xc] sm:$0xf] %v909
      %942 = vst [vmem:[#allocation9 + $0x10] sm:$0xf] %v910
      %943 = vst [vmem:[#allocation9 + $0x14] sm:$0xf] %v911
      %944 = vst [vmem:[#allocation9 + $0x18] sm:$0xf] %v912
      %945 = vst [vmem:[#allocation9 + $0x1c] sm:$0xf] %v913
      %946 = vst [vmem:[#allocation9 + $0x20] sm:$0xf] %v914
      %947 = vst [vmem:[#allocation9 + $0x24] sm:$0xf] %v915
      %948 = vst [vmem:[#allocation9 + $0x28] sm:$0xf] %v916
      %949 = vst [vmem:[#allocation9 + $0x2c] sm:$0xf] %v917
      %950 = vst [vmem:[#allocation9 + $0x30] sm:$0xf] %v918
      %951 = vst [vmem:[#allocation9 + $0x34] sm:$0xf] %v919
      %952 = vst [vmem:[#allocation9 + $0x38] sm:$0xf] %v920
      %953 = vst [vmem:[#allocation9 + $0x3c] sm:$0xf] %v921
    $region49: #{tpu_custom_call.1} parent=1 // pred_fallthru
      _
    // Predicated region
    $region50: #{tpu_custom_call.1} parent=1 // pred_check
      _
    $region51: #{tpu_custom_call.1} parent=1 // pred_check_branch
      %955 = sbr.rel (0) target = $region53
    $region52: #{tpu_custom_call.1} parent=1 // pred_region
      %s957 = ssub.s32 1024, 1024
      %958 = vsyncadd [#allocation5], %s957
      %s959 = sshll.u32 [#allocation9], 4
      %s960 = int_to_ptr.vmem [resolvable:$true] %s959
      %965 = dma.vmem_to_hbm [thread:$0]  %s960, 1024, %s7, [#allocation5], 64, 64, 4
    $region53: #{tpu_custom_call.1} parent=1 // pred_fallthru
      _
    // Predicated region
    $region54: #{tpu_custom_call.1} parent=1 // pred_check
      _
    $region55: #{tpu_custom_call.1} parent=1 // pred_check_branch
      %967 = sbr.rel (0) target = $region57
    $region56: #{tpu_custom_call.1} parent=1 // pred_region
      %968 = dma.done [#allocation5], 1024
    $region57: #{tpu_custom_call.1} parent=1 // pred_fallthru
      _
    %969 = vsyncpa [#allocation4], 1
    %970 = vsyncpa [#allocation7], 1
    %971 = vsyncpa [#allocation5], 1

</llo_original>
